<compile_context>
chip_gen: v7x
topology: tpu7x:2x2x1
jax: 0.10.0
libtpu: 0.0.40
codegen_flags: <defaults>
</compile_context>

<pallas_src>
import jax
import jax.numpy as jnp
from jax import lax
from jax.experimental import pallas as pl
from jax.experimental.pallas import tpu as pltpu

_LANE = 128      # lane width (last dim of a vreg)
_SUBLANE = 8     # f32 sublane (second-to-last dim)


def _round_up(x, m):
    return (x + m - 1) // m * m


def _num_tensorcores():
    """2 TensorCores per chip on v7x; v5e/v6e have 1. Best-effort detection."""
    try:
        kind = jax.devices()[0].device_kind.lower()
        if "v7" in kind:
            return 2
    except Exception:
        pass
    return 1


def _linear_kernel(x_ref, w_ref, b_ref, o_ref):
    # x_ref: (TM, K), w_ref: (out_dim, K) -> contract along K (dim 1 of both).
    # NT contraction: the MXU consumes the transposed operand directly, so the
    # grid-invariant W needs no transpose (neither host-side nor per-step).
    acc = lax.dot_general(
        x_ref[...], w_ref[...],
        dimension_numbers=(((1,), (1,)), ((), ())),
        preferred_element_type=jnp.float32,
    )
    o_ref[...] = (acc + b_ref[...]).astype(o_ref.dtype)


def _tile_plan(n, in_dim, out_dim, itemsize=4):
    """Pick the batch tile TM and an explicit VMEM limit.

    VMEM accounting uses the *padded* block layout (lanes rounded to 128,
    sublanes to 8) and includes the resident W/bias; the streamed-bytes bound
    uses the *actual* HBM traffic per step.
    """
    in_p = _round_up(in_dim, _LANE)
    out_p = _round_up(out_dim, _LANE)

    # Resident (grid-invariant) W + bias footprint, counted double-buffered.
    w_bytes = _round_up(out_dim, _SUBLANE) * in_p * itemsize
    b_bytes = _SUBLANE * out_p * itemsize
    resident = 2 * (w_bytes + b_bytes)

    # Total tile budget sized for the binding generation (v7x: 64 MiB/TC
    # physical, 32 MiB scoped default) with headroom for compiler scratch.
    budget = 24 * 1024 * 1024
    avail = budget - resident
    assert avail > 0, (
        "Resident weight/bias do not fit the VMEM tile budget "
        f"({resident} B > {budget} B); tile over out_dim/K for this size.")

    # (a) VMEM bound: double-buffered, lane-padded x + out tiles.
    per_row_vmem = 2 * itemsize * (in_p + out_p)
    tm_vmem = avail // per_row_vmem

    # (b) Amortization bound: stream ~4 MiB of real HBM traffic per grid step
    #     so the ~0.35 us fixed per-step cost is <~15% even at 3.2 TB/s.
    target_stream = 4 * 1024 * 1024
    per_row_hbm = itemsize * (in_dim + out_dim)
    tm_stream = max(target_stream // per_row_hbm, _SUBLANE)

    tm = min(tm_vmem, tm_stream, 8192)
    tm = max(tm // _SUBLANE * _SUBLANE, _SUBLANE)
    tm = min(tm, _round_up(n, _SUBLANE))

    # v7x only: guarantee >= 2 grid steps so both TensorCores get work.
    if _num_tensorcores() >= 2 and n > _SUBLANE:
        tm = min(tm, _round_up(pl.cdiv(n, 2), _SUBLANE))
        tm = max(tm, _SUBLANE)

    # Explicit limit derived from the actual plan (+25% / +2 MiB headroom),
    # never above v7x's 64 MiB physical VMEM per TensorCore.
    vmem_bytes = resident + 2 * tm * itemsize * (in_p + out_p)
    vmem_limit = min(int(vmem_bytes * 1.25) + (2 << 20), 64 * 1024 * 1024)
    return tm, vmem_limit


def linear_forward(x, weight, bias):
    """Pallas path: y = x @ weight.T + bias.

    x:      (N, in_dim)       float32
    weight: (out_dim, in_dim) float32
    bias:   (out_dim,)        float32
    returns (N, out_dim)      float32
    """
    n, in_dim = x.shape
    out_dim, in_dim_w = weight.shape
    assert in_dim == in_dim_w, "weight/in_dim mismatch"

    b2d = bias.reshape(1, out_dim)
    tm, vmem_limit = _tile_plan(n, in_dim, out_dim, x.dtype.itemsize)
    grid = (pl.cdiv(n, tm),)

    return pl.pallas_call(
        _linear_kernel,
        out_shape=jax.ShapeDtypeStruct((n, out_dim), x.dtype),
        grid_spec=pl.GridSpec(
            grid=grid,
            in_specs=[
                # Batch-tiled activations; last dim = full array dim (legal).
                pl.BlockSpec((tm, in_dim), lambda i: (i, 0)),
                # Grid-invariant W and bias stay resident in VMEM.
                pl.BlockSpec((out_dim, in_dim), lambda i: (0, 0)),
                pl.BlockSpec((1, out_dim), lambda i: (0, 0)),
            ],
            # Unpadded output block: last dim = full out_dim (no padded HBM
            # writeback, no post-call slice); ragged final tile is clipped.
            out_specs=pl.BlockSpec((tm, out_dim), lambda i: (i, 0)),
        ),
        compiler_params=pltpu.CompilerParams(
            # Independent batch tiles -> shard across TensorCores (v7x).
            dimension_semantics=("parallel",),
            vmem_limit_bytes=vmem_limit,
        ),
    )(x, weight, b2d)


def linear(x, weight, bias, *, min_rows_for_pallas=256):
    """Dispatch: for tiny problems the per-grid-step Pallas overhead dwarfs one
    MXU pass, so let XLA emit the fused matmul; otherwise use the kernel."""
    if x.shape[0] < min_rows_for_pallas:
        return x @ weight.T + bias
    return linear_forward(x, weight, bias)


if __name__ == "__main__":
    # Small shapes consistent with LinearRegression(input_dim, output_dim).
    batch, input_dim, output_dim = 8, 32, 16

    key = jax.random.PRNGKey(0)
    kx, kw, kb = jax.random.split(key, 3)

    # Deterministic init mimicking nn.Linear uniform(-1/sqrt(in), 1/sqrt(in)).
    bound = 1.0 / (input_dim ** 0.5)
    weight = jax.random.uniform(kw, (output_dim, input_dim), jnp.float32, -bound, bound)
    bias = jax.random.uniform(kb, (output_dim,), jnp.float32, -bound, bound)
    x = jax.random.normal(kx, (batch, input_dim), jnp.float32)

    # Exercise the Pallas kernel path directly (the `linear` dispatcher would
    # route these toy shapes to plain XLA).
    y = jax.jit(linear_forward)(x, weight, bias)
    jax.block_until_ready(y)

    # Correctness check against plain-JAX reference.
    y_ref = x @ weight.T + bias
    assert y.shape == (batch, output_dim)
    assert jnp.allclose(y, y_ref, atol=1e-5, rtol=1e-5)

    print("KERNEL_OK")
</pallas_src>

<mosaic_0001>
module attributes {stable_mosaic.version = 11 : i64} {
  func.func @_linear_kernel(%arg0: i32, %arg1: memref<8x32xf32, #tpu.memory_space<vmem>>, %arg2: memref<16x32xf32, #tpu.memory_space<vmem>>, %arg3: memref<1x16xf32, #tpu.memory_space<vmem>>, %arg4: memref<8x16xf32, #tpu.memory_space<vmem>>) attributes {dimension_semantics = [#tpu.dimension_semantics<parallel>], iteration_bounds = array<i64: 1>, scalar_prefetch = 0 : i64, scratch_operands = 0 : i64, tpu.core_type = #tpu.core_type<tc>, window_params = [{transform_indices = @transform_0, window_bounds = array<i64: 8, 32>}, {pipeline_mode = #tpu.pipeline_mode<synchronous>, transform_indices = @transform_1, window_bounds = array<i64: 16, 32>}, {pipeline_mode = #tpu.pipeline_mode<synchronous>, transform_indices = @transform_2, window_bounds = array<i64: 1, 16>}, {transform_indices = @transform_3, window_bounds = array<i64: 8, 16>}]} {
    %c0 = arith.constant 0 : index
    %c0_0 = arith.constant 0 : index
    %0 = vector.load %arg1[%c0, %c0_0] : memref<8x32xf32, #tpu.memory_space<vmem>>, vector<8x32xf32>
    %c0_1 = arith.constant 0 : index
    %c0_2 = arith.constant 0 : index
    %1 = vector.load %arg2[%c0_1, %c0_2] : memref<16x32xf32, #tpu.memory_space<vmem>>, vector<16x32xf32>
    %cst = arith.constant dense<0.000000e+00> : vector<8x16xf32>
    %2 = tpu.matmul %0, %1, %cst {dimension_numbers = #tpu.dot_dimension_numbers<[1], [1], [0], [0], [0, 0, 1, 0], [], []>} : vector<8x32xf32>, vector<16x32xf32>, vector<8x16xf32> -> vector<8x16xf32>
    %c0_3 = arith.constant 0 : index
    %c0_4 = arith.constant 0 : index
    %3 = vector.load %arg3[%c0_3, %c0_4] : memref<1x16xf32, #tpu.memory_space<vmem>>, vector<1x16xf32>
    %4 = vector.broadcast %3 : vector<1x16xf32> to vector<8x16xf32>
    %5 = arith.addf %2, %4 : vector<8x16xf32>
    %c0_5 = arith.constant 0 : index
    %c0_6 = arith.constant 0 : index
    %6 = vector.load %arg4[%c0_5, %c0_6] : memref<8x16xf32, #tpu.memory_space<vmem>>, vector<8x16xf32>
    tpu.vector_store %arg4[%c0_5, %c0_6], %5 {strides = array<i32>} : memref<8x16xf32, #tpu.memory_space<vmem>>, vector<8x16xf32>,
    return
  }
  func.func @transform_0(%arg0: i32) -> (i32, i32) {
    %c0_i32 = arith.constant 0 : i32
    %c0_i32_0 = arith.constant 0 : i32
    return %arg0, %c0_i32 : i32, i32
  }
  func.func @transform_1(%arg0: i32) -> (i32, i32) {
    %c0_i32 = arith.constant 0 : i32
    %c0_i32_0 = arith.constant 0 : i32
    %c0_i32_1 = arith.constant 0 : i32
    return %c0_i32, %c0_i32_0 : i32, i32
  }
  func.func @transform_2(%arg0: i32) -> (i32, i32) {
    %c0_i32 = arith.constant 0 : i32
    %c0_i32_0 = arith.constant 0 : i32
    %c0_i32_1 = arith.constant 0 : i32
    return %c0_i32, %c0_i32_0 : i32, i32
  }
  func.func @transform_3(%arg0: i32) -> (i32, i32) {
    %c0_i32 = arith.constant 0 : i32
    %c0_i32_0 = arith.constant 0 : i32
    return %arg0, %c0_i32 : i32, i32
  }
}

</mosaic_0001>

<llo_original>
// kernel: linear_forward.1
$region0: #{linear_forward.1}
  #allocation0 [shape = 'u32[]', space=smem, size = 0x4, offset = 0x4, fixed_abs, tag = 'smem constant byte address 0x4 - core index']
  #allocation1 [shape = 'u32[144,128]{1,0:T(1,128)}', space=vmem, size = 0x12000, scoped, tag = 'internal scratch']
  %s0 = inlined_call_operand.hbm [shape: f32[8,32], index: 0, kind: input, shape index: {}]
  %s1 = inlined_call_operand.hbm [shape: f32[16,32], index: 1, kind: input, shape index: {}]
  %s2 = inlined_call_operand.vmem [shape: f32[1,16], index: 2, kind: input, shape index: {}]
  %s3 = inlined_call_operand.hbm [shape: f32[8,16], index: 3, kind: output, shape index: {}]
  %s4 = sld [smem:[#allocation0]]
  $region30: #{linear_forward.1} parent=0
    _
  %s6 = ssub.s32 1, %s4
  %s7 = scalar_select 0, %s6, %s4
  $region1: #{linear_forward.1} parent=0
    #allocation2 [shape = 'u8[4096]{0}', space=vmem, size = 0x1000, scoped, tag = 'input window, operand 0, single buffered']
    #allocation3 [shape = 's32[1]{0}', space=sflag, size = 0x4, scoped, tag = 'scoped memory for linear_forward.1']
    #allocation4 [shape = 's32[1]{0}', space=sflag, size = 0x4, scoped, tag = 'scoped memory for linear_forward.1']
    #allocation5 [shape = 'u8[8192]{0}', space=vmem, size = 0x2000, scoped, tag = 'input window, operand 1, single buffered']
    #allocation6 [shape = 's32[1]{0}', space=sflag, size = 0x4, scoped, tag = 'scoped memory for linear_forward.1']
    #allocation7 [shape = 'u8[4096]{0}', space=vmem, size = 0x1000, scoped, tag = 'output window, operand 0, single buffered']
    %8 = vsyncpa [#allocation3], 0
    %9 = vsyncpa [#allocation6], 0
    %10 = vsyncpa [#allocation4], 0
    // Predicated region
    $region2: #{linear_forward.1} parent=1 // pred_check
      _
    $region3: #{linear_forward.1} parent=1 // pred_check_branch
      %12 = sbr.rel (0) target = $region5
    $region4: #{linear_forward.1} parent=1 // pred_region
      %s14 = ssub.s32 128, 128
      %15 = vsyncadd [#allocation3], %s14
      %s17 = sshll.u32 [#allocation2], 4
      %s18 = int_to_ptr.vmem [resolvable:$true] %s17
      %20 = dma.hbm_to_vmem [thread:$0]  %s0, 128, %s18, [#allocation3]
    $region5: #{linear_forward.1} parent=1 // pred_fallthru
      _
    // Predicated region
    $region6: #{linear_forward.1} parent=1 // pred_check
      _
    $region7: #{linear_forward.1} parent=1 // pred_check_branch
      %22 = sbr.rel (0) target = $region9
    $region8: #{linear_forward.1} parent=1 // pred_region
      %s24 = ssub.s32 256, 256
      %25 = vsyncadd [#allocation6], %s24
      %s26 = sshll.u32 [#allocation5], 4
      %s27 = int_to_ptr.vmem [resolvable:$true] %s26
      %32 = dma.hbm_to_vmem [thread:$0]  %s1, 256, %s27, [#allocation6], 128, 128, 8
    $region9: #{linear_forward.1} parent=1 // pred_fallthru
      _
    // Predicated region
    $region10: #{linear_forward.1} parent=1 // pred_check
      _
    $region11: #{linear_forward.1} parent=1 // pred_check_branch
      %34 = sbr.rel (0) target = $region13
    $region12: #{linear_forward.1} parent=1 // pred_region
      _
    $region13: #{linear_forward.1} parent=1 // pred_fallthru
      _
    // Predicated region
    $region14: #{linear_forward.1} parent=1 // pred_check
      _
    $region15: #{linear_forward.1} parent=1 // pred_check_branch
      %36 = sbr.rel (0) target = $region17
    $region16: #{linear_forward.1} parent=1 // pred_region
      %37 = dma.done [#allocation3], 128
    $region17: #{linear_forward.1} parent=1 // pred_fallthru
      _
    // Predicated region
    $region18: #{linear_forward.1} parent=1 // pred_check
      _
    $region19: #{linear_forward.1} parent=1 // pred_check_branch
      %39 = sbr.rel (0) target = $region21
    $region20: #{linear_forward.1} parent=1 // pred_region
      %40 = dma.done [#allocation6], 256
    $region21: #{linear_forward.1} parent=1 // pred_fallthru
      _
    %v41 = vld [vmem:[#allocation2] sm:$0xff]
    %v42 = vld [vmem:[#allocation5] sm:$0xff]
    %v43 = vld [vmem:[#allocation5 + $0x8] sm:$0xff]
    %v44 = vld [vmem:[%s2] sm:$0x1]
    %v46 = vlaneseq
    %v47 = vshrl.u32 %v46, 7
    %v48 = vsub.s32 0, %v47
    %v49 = vrot.slane %v44, %v48
    %vm51 = vcmask 261120
    %v53 = vsel %vm51, %v41, 0
    %v56 = vsel %vm51, %v42, 0
    %v59 = vsel %vm51, %v43, 0
    %61 = vmatprep.subr.mxu0 0.0
    %62 = vmatpush1.xpose.msra.mxu0 %v56
    %63 = vmatprep.subr.mxu0 0.0
    %64 = vmatpush1.xpose.msra.mxu0 %v59
    %65 = vmatprep.subr.mxu0 0.0
    %66 = vmatpush1.xpose.msra.mxu0 0.0
    %67 = vmatprep.subr.mxu0 0.0
    %68 = vmatpush1.xpose.msra.mxu0 0.0
    %69 = vmatprep.subr.mxu0 0.0
    %70 = vmatpush1.xpose.msra.mxu0 0.0
    %71 = vmatprep.subr.mxu0 0.0
    %72 = vmatpush1.xpose.msra.mxu0 0.0
    %73 = vmatprep.subr.mxu0 0.0
    %74 = vmatpush1.xpose.msra.mxu0 0.0
    %75 = vmatprep.subr.mxu0 0.0
    %76 = vmatpush1.xpose.msra.mxu0 0.0
    %77 = vmatprep.subr.mxu0 0.0
    %78 = vmatpush1.xpose.msra.mxu0 0.0
    %79 = vmatprep.subr.mxu0 0.0
    %80 = vmatpush1.xpose.msra.mxu0 0.0
    %81 = vmatprep.subr.mxu0 0.0
    %82 = vmatpush1.xpose.msra.mxu0 0.0
    %83 = vmatprep.subr.mxu0 0.0
    %84 = vmatpush1.xpose.msra.mxu0 0.0
    %85 = vmatprep.subr.mxu0 0.0
    %86 = vmatpush1.xpose.msra.mxu0 0.0
    %87 = vmatprep.subr.mxu0 0.0
    %88 = vmatpush1.xpose.msra.mxu0 0.0
    %89 = vmatprep.subr.mxu0 0.0
    %90 = vmatpush1.xpose.msra.mxu0 0.0
    %91 = vmatprep.subr.mxu0 0.0
    %92 = vmatpush1.xpose.msra.mxu0 0.0
    %93 = vmatprep.subr.mxu0 0.0
    %94 = vmatpush1.xpose.msra.mxu0 0.0
    %95 = vmatprep.subr.mxu0 0.0
    %96 = vmatpush1.xpose.msra.mxu0 0.0
    %97 = vmatprep.subr.mxu0 0.0
    %98 = vmatpush1.xpose.msra.mxu0 0.0
    %99 = vmatprep.subr.mxu0 0.0
    %100 = vmatpush1.xpose.msra.mxu0 0.0
    %101 = vmatprep.subr.mxu0 0.0
    %102 = vmatpush1.xpose.msra.mxu0 0.0
    %103 = vmatprep.subr.mxu0 0.0
    %104 = vmatpush1.xpose.msra.mxu0 0.0
    %105 = vmatprep.subr.mxu0 0.0
    %106 = vmatpush1.xpose.msra.mxu0 0.0
    %107 = vmatprep.subr.mxu0 0.0
    %108 = vmatpush1.xpose.msra.mxu0 0.0
    %109 = vmatprep.subr.mxu0 0.0
    %110 = vmatpush1.xpose.msra.mxu0 0.0
    %111 = vmatprep.subr.mxu0 0.0
    %112 = vmatpush1.xpose.msra.mxu0 0.0
    %113 = vmatprep.subr.mxu0 0.0
    %114 = vmatpush1.xpose.msra.mxu0 0.0
    %115 = vmatprep.subr.mxu0 0.0
    %116 = vmatpush1.xpose.msra.mxu0 0.0
    %117 = vmatprep.subr.mxu0 0.0
    %118 = vmatpush1.xpose.msra.mxu0 0.0
    %119 = vmatprep.subr.mxu0 0.0
    %120 = vmatpush1.xpose.msra.mxu0 0.0
    %121 = vmatprep.subr.mxu0 0.0
    %122 = vmatpush1.xpose.msra.mxu0 0.0
    %123 = vmatprep.subr.mxu0 0.0
    %124 = vmatpush1.xpose.msra.mxu0 0.0
    %125 = vmatprep.mubr.f32.mxu0 0.0
    %126 = vmatmul.mubr.f32.gmra.mrb[0].mxu0 %v53
    %v127 = vpop.f32.mrb[0].mxu0
    %v128 = vadd.f32 %v49, %v127
    %v129 = vpop.f32.mrb[0].mxu0
    %130 = vdwg.mxu0
    %vm131 = vcmask 130048
    %132 = vst.msk [vmem:[#allocation7] sm:$0xff] %vm131, %v128
    // Predicated region
    $region22: #{linear_forward.1} parent=1 // pred_check
      _
    $region23: #{linear_forward.1} parent=1 // pred_check_branch
      %134 = sbr.rel (0) target = $region25
    $region24: #{linear_forward.1} parent=1 // pred_region
      %s136 = ssub.s32 128, 128
      %137 = vsyncadd [#allocation4], %s136
      %s139 = sshll.u32 [#allocation7], 4
      %s140 = int_to_ptr.vmem [resolvable:$true] %s139
      %142 = dma.vmem_to_hbm [thread:$0]  %s140, 128, %s3, [#allocation4]
    $region25: #{linear_forward.1} parent=1 // pred_fallthru
      _
    // Predicated region
    $region26: #{linear_forward.1} parent=1 // pred_check
      _
    $region27: #{linear_forward.1} parent=1 // pred_check_branch
      %144 = sbr.rel (0) target = $region29
    $region28: #{linear_forward.1} parent=1 // pred_region
      %145 = dma.done [#allocation4], 128
    $region29: #{linear_forward.1} parent=1 // pred_fallthru
      _
    %146 = vsyncpa [#allocation3], 1
    %147 = vsyncpa [#allocation6], 1
    %148 = vsyncpa [#allocation4], 1

</llo_original>
